<compile_context>
chip_gen: v5e
topology: v5e:2x2
jax: 0.10.0
libtpu: 0.0.40
codegen_flags: <defaults>
</compile_context>

<pallas_src>
import functools

import jax
import jax.numpy as jnp
from jax.experimental import pallas as pl
from jax.experimental.pallas import tpu as pltpu


def _round_up(x, m):
    return (x + m - 1) // m * m


def _relukan_kernel(x_ref, low_ref, high_ref, w_ref, b_ref, o_ref,
                    acc_ref, basis_ref, *, p_bins, tk, bf16_math):
    # x_ref:     (tm, tk)            f32   input slice, lanes = input features
    # low_ref:   (P, tk)             f32   phase_low slice for this I-tile
    # high_ref:  (P, tk)             f32   phase_height slice for this I-tile
    # w_ref:     (P*tk, tn)          bf16  r^2-scaled weights, row = p*tk + i
    # b_ref:     (1, tn)             f32   bias
    # o_ref:     (tm, tn)                  output tile
    # acc_ref:   (tm, tn)            f32   resident accumulator (across kk)
    # basis_ref: (tm, P*tk)          bf16  staging buffer for the basis
    kk = pl.program_id(2)

    @pl.when(kk == 0)
    def _():
        # Fold the bias into the accumulator init (saves an epilogue add).
        acc_ref[...] = jnp.broadcast_to(b_ref[...], acc_ref.shape)

    cdt = jnp.bfloat16 if bf16_math else jnp.float32
    x = x_ref[...].astype(cdt)
    low = low_ref[...].astype(cdt)
    high = high_ref[...].astype(cdt)
    zero = jnp.array(0.0, dtype=cdt)

    # Small static loop over the g+k phase bins: pure VPU work, each bin's
    # squared basis is staged (bf16, p-major) for one big-K MXU matmul.
    for p in range(p_bins):
        x1 = jnp.maximum(x - low[p:p + 1, :], zero)        # relu(x - phase_low)
        x2 = jnp.maximum(high[p:p + 1, :] - x, zero)       # relu(phase_height - x)
        b = x1 * x2                                        # r folded into weights
        b = b * b
        basis_ref[:, p * tk:(p + 1) * tk] = b.astype(jnp.bfloat16)

    # Single K = p_bins*tk matmul into the resident f32 accumulator.
    acc_ref[...] += jnp.dot(basis_ref[...], w_ref[...],
                            preferred_element_type=jnp.float32)

    @pl.when(kk == pl.num_programs(2) - 1)
    def _():
        o_ref[...] = acc_ref[...].astype(o_ref.dtype)


def _select_tiles(batch, input_size, output_size, p_bins, tm, tn, tk, budget):
    """Clamp tiles to the problem and to a VMEM budget (multiples of 8/128)."""
    tm = min(tm, _round_up(batch, 8))
    tk = min(tk, _round_up(input_size, 128))
    tn_full = _round_up(output_size, 128)
    tn = min(tn, tn_full)

    def fp(tm_, tn_, tk_):
        return (tm_ * tk_ * 4 * 2                 # x tile, double buffered (f32)
                + 2 * p_bins * tk_ * 4 * 2        # phase tables, double buffered
                + p_bins * tk_ * tn_ * 2 * 2      # bf16 weight block, double buffered
                + tn_ * 4 * 2                     # bias
                + tm_ * tn_ * 4 * 2               # output tile, double buffered
                + tm_ * tn_ * 4                   # f32 accumulator scratch
                + tm_ * p_bins * tk_ * 2)         # bf16 basis staging scratch

    # Cover all outputs in a single j tile if the budget allows
    # (avoids recomputing the basis once per output tile).
    if tn < tn_full and fp(tm, tn_full, tk) <= budget:
        tn = tn_full
    # Shrink tk, then tn, then tm until the footprint fits.
    while fp(tm, tn, tk) > budget and tk > 128:
        tk = max(128, (tk // 2) // 128 * 128)
    while fp(tm, tn, tk) > budget and tn > 128:
        tn = max(128, (tn // 2) // 128 * 128)
    while fp(tm, tn, tk) > budget and tm > 8:
        tm = max(8, (tm // 2) // 8 * 8)
    return tm, tn, tk, fp(tm, tn, tk)


def relukan_forward(x, phase_low, phase_height, conv_w, conv_b, *, g, k,
                    tm=512, tn=256, tk=512, bf16_basis_math=False,
                    vmem_budget_bytes=28 * 1024 * 1024):
    """ReLUKANLayer forward.

    x:            (B, input_size)                      f32
    phase_low:    (input_size, g+k)                    f32  (module layout)
    phase_height: (input_size, g+k)                    f32
    conv_w:       (output_size, 1, g+k, input_size)    f32
    conv_b:       (output_size,)                       f32
    """
    batch, input_size = x.shape
    output_size = conv_w.shape[0]
    p_bins = g + k
    r = 4.0 * g * g / ((k + 1) * (k + 1))

    # ---- tile sizes (footprint-aware, (8,128)-aligned) ---------------------
    tm, tn, tk, fp_bytes = _select_tiles(batch, input_size, output_size,
                                         p_bins, tm, tn, tk, vmem_budget_bytes)
    b_pad = _round_up(batch, tm)
    o_pad = _round_up(output_size, tn)
    i_pad = _round_up(input_size, tk)

    # If the whole problem fits in a single (i, j) tile, split the batch tile
    # so a parallel grid axis has extent >= 2 (lets v7x use both TensorCores).
    if (b_pad // tm) * (o_pad // tn) == 1 and batch > 8:
        tm = max(8, _round_up(-(-batch // 2), 8))
        b_pad = _round_up(batch, tm)

    num_kt = i_pad // tk

    # ---- glue: lane-major layouts, r^2 folded into weights (f32), bf16 -----
    # Weight rows ordered (kk-tile, p, i_local) so the kk-th (p_bins*tk, tn)
    # block pairs basis[b, p, i] with conv_w[o, 0, p, i] * r^2 — exactly the
    # reference permute(0,2,1) + flatten + conv contraction.
    w_t = jnp.transpose(conv_w[:, 0, :, :], (1, 2, 0)).astype(jnp.float32)
    w_t = w_t * jnp.float32(r * r)                               # (P, I, O)
    w_t = jnp.pad(w_t, ((0, 0), (0, i_pad - input_size), (0, o_pad - output_size)))
    w_t = w_t.reshape(p_bins, num_kt, tk, o_pad)
    w_t = jnp.transpose(w_t, (1, 0, 2, 3))                       # (kt, P, tk, O)
    w_flat = w_t.reshape(num_kt * p_bins * tk, o_pad).astype(jnp.bfloat16)

    low_t = jnp.transpose(phase_low).astype(jnp.float32)         # (P, I)
    high_t = jnp.transpose(phase_height).astype(jnp.float32)     # (P, I)
    low_p = jnp.pad(low_t, ((0, 0), (0, i_pad - input_size)))
    high_p = jnp.pad(high_t, ((0, 0), (0, i_pad - input_size)))

    x_p = jnp.pad(x.astype(jnp.float32),
                  ((0, b_pad - batch), (0, i_pad - input_size)))
    b_p = jnp.pad(conv_b.reshape(1, output_size).astype(jnp.float32),
                  ((0, 0), (0, o_pad - output_size)))

    grid = (b_pad // tm, o_pad // tn, num_kt)
    kernel = functools.partial(_relukan_kernel, p_bins=p_bins, tk=tk,
                               bf16_math=bf16_basis_math)

    vmem_limit = int(min(60 * 1024 * 1024,
                         max(32 * 1024 * 1024, int(fp_bytes * 1.25))))

    out = pl.pallas_call(
        kernel,
        out_shape=jax.ShapeDtypeStruct((b_pad, o_pad), jnp.float32),
        grid_spec=pltpu.PrefetchScalarGridSpec(
            num_scalar_prefetch=0,
            grid=grid,
            in_specs=[
                pl.BlockSpec((tm, tk), lambda i, j, kk: (i, kk)),             # x
                pl.BlockSpec((p_bins, tk), lambda i, j, kk: (0, kk)),         # phase_low
                pl.BlockSpec((p_bins, tk), lambda i, j, kk: (0, kk)),         # phase_height
                pl.BlockSpec((p_bins * tk, tn), lambda i, j, kk: (kk, j)),    # weight
                pl.BlockSpec((1, tn), lambda i, j, kk: (0, j)),               # bias
            ],
            out_specs=pl.BlockSpec((tm, tn), lambda i, j, kk: (i, j)),
            scratch_shapes=[
                pltpu.VMEM((tm, tn), jnp.float32),                # accumulator
                pltpu.VMEM((tm, p_bins * tk), jnp.bfloat16),      # basis staging
            ],
        ),
        compiler_params=pltpu.CompilerParams(
            dimension_semantics=("parallel", "parallel", "arbitrary"),
            vmem_limit_bytes=vmem_limit),
    )(x_p, low_p, high_p, w_flat, b_p)

    return out[:batch, :output_size]


def _reference_forward(x, phase_low, phase_height, conv_w, conv_b, *, g, k):
    # Pure-JAX reference mirroring the PyTorch module exactly (f32).
    r = 4.0 * g * g / ((k + 1) * (k + 1))
    x1 = jnp.maximum(x[:, :, None] - phase_low[None], 0.0)
    x2 = jnp.maximum(phase_height[None] - x[:, :, None], 0.0)
    basis = (x1 * x2 * r) ** 2                       # (B, I, P)
    basis = jnp.transpose(basis, (0, 2, 1))          # (B, P, I)  (== permute(0,2,1))
    flat = basis.reshape(basis.shape[0], -1)         # conv flattens (P, I) row-major
    w = conv_w[:, 0, :, :].reshape(conv_w.shape[0], -1)  # (O, P*I)
    return flat @ w.T + conv_b[None, :]


if __name__ == "__main__":
    # Small, deterministic setup consistent with the module.
    input_size, g, k, output_size = 8, 5, 3, 16
    batch = 4
    p = g + k

    key = jax.random.PRNGKey(0)
    kx, kw, kb = jax.random.split(key, 3)

    x = jax.random.uniform(kx, (batch, input_size), jnp.float32)

    # phase_low / phase_height exactly as in __init__.
    phase_low_row = jnp.arange(-k, g, dtype=jnp.float32) / g               # (g+k,)
    phase_low = jnp.tile(phase_low_row[None, :], (input_size, 1))          # (I, P)
    phase_height = phase_low + (k + 1) / g                                 # (I, P)

    # Deterministic synthetic Conv2d(1, output_size, (g+k, input_size)) params.
    conv_w = jax.random.normal(kw, (output_size, 1, p, input_size), jnp.float32) * 0.1
    conv_b = jax.random.normal(kb, (output_size,), jnp.float32) * 0.1

    out = relukan_forward(x, phase_low, phase_height, conv_w, conv_b, g=g, k=k)
    out = jax.block_until_ready(out)

    ref = _reference_forward(x, phase_low, phase_height, conv_w, conv_b, g=g, k=k)
    assert out.shape == (batch, output_size)
    # bf16 operands into the MXU (f32 accumulate) -> slightly looser tolerance.
    assert jnp.allclose(out, ref, atol=3e-2, rtol=2e-2), (
        f"max abs diff {jnp.max(jnp.abs(out - ref))}")

    print("KERNEL_OK")
</pallas_src>

<mosaic_0001>
module attributes {stable_mosaic.version = 11 : i64} {
  func.func @_relukan_kernel(%arg0: i32, %arg1: i32, %arg2: i32, %arg3: memref<8x128xf32, #tpu.memory_space<vmem>>, %arg4: memref<8x128xf32, #tpu.memory_space<vmem>>, %arg5: memref<8x128xf32, #tpu.memory_space<vmem>>, %arg6: memref<1024x128xbf16, #tpu.memory_space<vmem>>, %arg7: memref<1x128xf32, #tpu.memory_space<vmem>>, %arg8: memref<8x128xf32, #tpu.memory_space<vmem>>, %arg9: memref<8x128xf32, #tpu.memory_space<vmem>>, %arg10: memref<8x1024xbf16, #tpu.memory_space<vmem>>) attributes {dimension_semantics = [#tpu.dimension_semantics<parallel>, #tpu.dimension_semantics<parallel>, #tpu.dimension_semantics<arbitrary>], iteration_bounds = array<i64: 1, 1, 1>, scalar_prefetch = 0 : i64, scratch_operands = 2 : i64, tpu.core_type = #tpu.core_type<tc>, window_params = [{transform_indices = @transform_0, window_bounds = array<i64: 8, 128>}, {transform_indices = @transform_1, window_bounds = array<i64: 8, 128>}, {transform_indices = @transform_2, window_bounds = array<i64: 8, 128>}, {transform_indices = @transform_3, window_bounds = array<i64: 1024, 128>}, {transform_indices = @transform_4, window_bounds = array<i64: 1, 128>}, {transform_indices = @transform_5, window_bounds = array<i64: 8, 128>}]} {
    %c0_i32 = arith.constant 0 : i32
    %0 = arith.cmpi eq, %arg2, %c0_i32 : i32
    %1 = arith.extui %0 : i1 to i32
    %c0_i32_0 = arith.constant 0 : i32
    %2 = arith.cmpi ne, %1, %c0_i32_0 : i32
    scf.if %2 {
      %c0_41 = arith.constant 0 : index
      %c0_42 = arith.constant 0 : index
      %127 = vector.load %arg7[%c0_41, %c0_42] : memref<1x128xf32, #tpu.memory_space<vmem>>, vector<1x128xf32>
      %128 = vector.shape_cast %127 : vector<1x128xf32> to vector<1x128xf32>
      %129 = vector.broadcast %128 : vector<1x128xf32> to vector<8x128xf32>
      %c0_43 = arith.constant 0 : index
      %c0_44 = arith.constant 0 : index
      %130 = vector.load %arg9[%c0_43, %c0_44] : memref<8x128xf32, #tpu.memory_space<vmem>>, vector<8x128xf32>
      tpu.vector_store %arg9[%c0_43, %c0_44], %129 {strides = array<i32>} : memref<8x128xf32, #tpu.memory_space<vmem>>, vector<8x128xf32>,
    } else {
    }
    %c0 = arith.constant 0 : index
    %c0_1 = arith.constant 0 : index
    %3 = vector.load %arg3[%c0, %c0_1] : memref<8x128xf32, #tpu.memory_space<vmem>>, vector<8x128xf32>
    %c0_2 = arith.constant 0 : index
    %c0_3 = arith.constant 0 : index
    %4 = vector.load %arg4[%c0_2, %c0_3] : memref<8x128xf32, #tpu.memory_space<vmem>>, vector<8x128xf32>
    %c0_4 = arith.constant 0 : index
    %c0_5 = arith.constant 0 : index
    %5 = vector.load %arg5[%c0_4, %c0_5] : memref<8x128xf32, #tpu.memory_space<vmem>>, vector<8x128xf32>
    %6 = vector.extract_strided_slice %4 {offsets = [0, 0], sizes = [1, 128], strides = [1, 1]} : vector<8x128xf32> to vector<1x128xf32>
    %7 = vector.broadcast %6 : vector<1x128xf32> to vector<8x128xf32>
    %8 = arith.subf %3, %7 : vector<8x128xf32>
    %cst = arith.constant 0.000000e+00 : f32
    %9 = vector.broadcast %cst : f32 to vector<8x128xf32>
    %10 = arith.maximumf %8, %9 : vector<8x128xf32>
    %11 = vector.extract_strided_slice %5 {offsets = [0, 0], sizes = [1, 128], strides = [1, 1]} : vector<8x128xf32> to vector<1x128xf32>
    %12 = vector.broadcast %11 : vector<1x128xf32> to vector<8x128xf32>
    %13 = arith.subf %12, %3 : vector<8x128xf32>
    %cst_6 = arith.constant 0.000000e+00 : f32
    %14 = vector.broadcast %cst_6 : f32 to vector<8x128xf32>
    %15 = arith.maximumf %13, %14 : vector<8x128xf32>
    %16 = arith.mulf %10, %15 : vector<8x128xf32>
    %17 = arith.mulf %16, %16 : vector<8x128xf32>
    %18 = arith.truncf %17 : vector<8x128xf32> to vector<8x128xbf16>
    %c0_7 = arith.constant 0 : index
    %c0_8 = arith.constant 0 : index
    %19 = vector.load %arg10[%c0_7, %c0_8] : memref<8x1024xbf16, #tpu.memory_space<vmem>>, vector<8x128xbf16>
    tpu.vector_store %arg10[%c0_7, %c0_8], %18 {strides = array<i32>} : memref<8x1024xbf16, #tpu.memory_space<vmem>>, vector<8x128xbf16>,
    %20 = vector.extract_strided_slice %4 {offsets = [1, 0], sizes = [1, 128], strides = [1, 1]} : vector<8x128xf32> to vector<1x128xf32>
    %21 = vector.broadcast %20 : vector<1x128xf32> to vector<8x128xf32>
    %22 = arith.subf %3, %21 : vector<8x128xf32>
    %cst_9 = arith.constant 0.000000e+00 : f32
    %23 = vector.broadcast %cst_9 : f32 to vector<8x128xf32>
    %24 = arith.maximumf %22, %23 : vector<8x128xf32>
    %25 = vector.extract_strided_slice %5 {offsets = [1, 0], sizes = [1, 128], strides = [1, 1]} : vector<8x128xf32> to vector<1x128xf32>
    %26 = vector.broadcast %25 : vector<1x128xf32> to vector<8x128xf32>
    %27 = arith.subf %26, %3 : vector<8x128xf32>
    %cst_10 = arith.constant 0.000000e+00 : f32
    %28 = vector.broadcast %cst_10 : f32 to vector<8x128xf32>
    %29 = arith.maximumf %27, %28 : vector<8x128xf32>
    %30 = arith.mulf %24, %29 : vector<8x128xf32>
    %31 = arith.mulf %30, %30 : vector<8x128xf32>
    %32 = arith.truncf %31 : vector<8x128xf32> to vector<8x128xbf16>
    %c0_11 = arith.constant 0 : index
    %c128 = arith.constant 128 : index
    %33 = vector.load %arg10[%c0_11, %c128] : memref<8x1024xbf16, #tpu.memory_space<vmem>>, vector<8x128xbf16>
    tpu.vector_store %arg10[%c0_11, %c128], %32 {strides = array<i32>} : memref<8x1024xbf16, #tpu.memory_space<vmem>>, vector<8x128xbf16>,
    %34 = vector.extract_strided_slice %4 {offsets = [2, 0], sizes = [1, 128], strides = [1, 1]} : vector<8x128xf32> to vector<1x128xf32>
    %35 = vector.broadcast %34 : vector<1x128xf32> to vector<8x128xf32>
    %36 = arith.subf %3, %35 : vector<8x128xf32>
    %cst_12 = arith.constant 0.000000e+00 : f32
    %37 = vector.broadcast %cst_12 : f32 to vector<8x128xf32>
    %38 = arith.maximumf %36, %37 : vector<8x128xf32>
    %39 = vector.extract_strided_slice %5 {offsets = [2, 0], sizes = [1, 128], strides = [1, 1]} : vector<8x128xf32> to vector<1x128xf32>
    %40 = vector.broadcast %39 : vector<1x128xf32> to vector<8x128xf32>
    %41 = arith.subf %40, %3 : vector<8x128xf32>
    %cst_13 = arith.constant 0.000000e+00 : f32
    %42 = vector.broadcast %cst_13 : f32 to vector<8x128xf32>
    %43 = arith.maximumf %41, %42 : vector<8x128xf32>
    %44 = arith.mulf %38, %43 : vector<8x128xf32>
    %45 = arith.mulf %44, %44 : vector<8x128xf32>
    %46 = arith.truncf %45 : vector<8x128xf32> to vector<8x128xbf16>
    %c0_14 = arith.constant 0 : index
    %c256 = arith.constant 256 : index
    %47 = vector.load %arg10[%c0_14, %c256] : memref<8x1024xbf16, #tpu.memory_space<vmem>>, vector<8x128xbf16>
    tpu.vector_store %arg10[%c0_14, %c256], %46 {strides = array<i32>} : memref<8x1024xbf16, #tpu.memory_space<vmem>>, vector<8x128xbf16>,
    %48 = vector.extract_strided_slice %4 {offsets = [3, 0], sizes = [1, 128], strides = [1, 1]} : vector<8x128xf32> to vector<1x128xf32>
    %49 = vector.broadcast %48 : vector<1x128xf32> to vector<8x128xf32>
    %50 = arith.subf %3, %49 : vector<8x128xf32>
    %cst_15 = arith.constant 0.000000e+00 : f32
    %51 = vector.broadcast %cst_15 : f32 to vector<8x128xf32>
    %52 = arith.maximumf %50, %51 : vector<8x128xf32>
    %53 = vector.extract_strided_slice %5 {offsets = [3, 0], sizes = [1, 128], strides = [1, 1]} : vector<8x128xf32> to vector<1x128xf32>
    %54 = vector.broadcast %53 : vector<1x128xf32> to vector<8x128xf32>
    %55 = arith.subf %54, %3 : vector<8x128xf32>
    %cst_16 = arith.constant 0.000000e+00 : f32
    %56 = vector.broadcast %cst_16 : f32 to vector<8x128xf32>
    %57 = arith.maximumf %55, %56 : vector<8x128xf32>
    %58 = arith.mulf %52, %57 : vector<8x128xf32>
    %59 = arith.mulf %58, %58 : vector<8x128xf32>
    %60 = arith.truncf %59 : vector<8x128xf32> to vector<8x128xbf16>
    %c0_17 = arith.constant 0 : index
    %c384 = arith.constant 384 : index
    %61 = vector.load %arg10[%c0_17, %c384] : memref<8x1024xbf16, #tpu.memory_space<vmem>>, vector<8x128xbf16>
    tpu.vector_store %arg10[%c0_17, %c384], %60 {strides = array<i32>} : memref<8x1024xbf16, #tpu.memory_space<vmem>>, vector<8x128xbf16>,
    %62 = vector.extract_strided_slice %4 {offsets = [4, 0], sizes = [1, 128], strides = [1, 1]} : vector<8x128xf32> to vector<1x128xf32>
    %63 = vector.broadcast %62 : vector<1x128xf32> to vector<8x128xf32>
    %64 = arith.subf %3, %63 : vector<8x128xf32>
    %cst_18 = arith.constant 0.000000e+00 : f32
    %65 = vector.broadcast %cst_18 : f32 to vector<8x128xf32>
    %66 = arith.maximumf %64, %65 : vector<8x128xf32>
    %67 = vector.extract_strided_slice %5 {offsets = [4, 0], sizes = [1, 128], strides = [1, 1]} : vector<8x128xf32> to vector<1x128xf32>
    %68 = vector.broadcast %67 : vector<1x128xf32> to vector<8x128xf32>
    %69 = arith.subf %68, %3 : vector<8x128xf32>
    %cst_19 = arith.constant 0.000000e+00 : f32
    %70 = vector.broadcast %cst_19 : f32 to vector<8x128xf32>
    %71 = arith.maximumf %69, %70 : vector<8x128xf32>
    %72 = arith.mulf %66, %71 : vector<8x128xf32>
    %73 = arith.mulf %72, %72 : vector<8x128xf32>
    %74 = arith.truncf %73 : vector<8x128xf32> to vector<8x128xbf16>
    %c0_20 = arith.constant 0 : index
    %c512 = arith.constant 512 : index
    %75 = vector.load %arg10[%c0_20, %c512] : memref<8x1024xbf16, #tpu.memory_space<vmem>>, vector<8x128xbf16>
    tpu.vector_store %arg10[%c0_20, %c512], %74 {strides = array<i32>} : memref<8x1024xbf16, #tpu.memory_space<vmem>>, vector<8x128xbf16>,
    %76 = vector.extract_strided_slice %4 {offsets = [5, 0], sizes = [1, 128], strides = [1, 1]} : vector<8x128xf32> to vector<1x128xf32>
    %77 = vector.broadcast %76 : vector<1x128xf32> to vector<8x128xf32>
    %78 = arith.subf %3, %77 : vector<8x128xf32>
    %cst_21 = arith.constant 0.000000e+00 : f32
    %79 = vector.broadcast %cst_21 : f32 to vector<8x128xf32>
    %80 = arith.maximumf %78, %79 : vector<8x128xf32>
    %81 = vector.extract_strided_slice %5 {offsets = [5, 0], sizes = [1, 128], strides = [1, 1]} : vector<8x128xf32> to vector<1x128xf32>
    %82 = vector.broadcast %81 : vector<1x128xf32> to vector<8x128xf32>
    %83 = arith.subf %82, %3 : vector<8x128xf32>
    %cst_22 = arith.constant 0.000000e+00 : f32
    %84 = vector.broadcast %cst_22 : f32 to vector<8x128xf32>
    %85 = arith.maximumf %83, %84 : vector<8x128xf32>
    %86 = arith.mulf %80, %85 : vector<8x128xf32>
    %87 = arith.mulf %86, %86 : vector<8x128xf32>
    %88 = arith.truncf %87 : vector<8x128xf32> to vector<8x128xbf16>
    %c0_23 = arith.constant 0 : index
    %c640 = arith.constant 640 : index
    %89 = vector.load %arg10[%c0_23, %c640] : memref<8x1024xbf16, #tpu.memory_space<vmem>>, vector<8x128xbf16>
    tpu.vector_store %arg10[%c0_23, %c640], %88 {strides = array<i32>} : memref<8x1024xbf16, #tpu.memory_space<vmem>>, vector<8x128xbf16>,
    %90 = vector.extract_strided_slice %4 {offsets = [6, 0], sizes = [1, 128], strides = [1, 1]} : vector<8x128xf32> to vector<1x128xf32>
    %91 = vector.broadcast %90 : vector<1x128xf32> to vector<8x128xf32>
    %92 = arith.subf %3, %91 : vector<8x128xf32>
    %cst_24 = arith.constant 0.000000e+00 : f32
    %93 = vector.broadcast %cst_24 : f32 to vector<8x128xf32>
    %94 = arith.maximumf %92, %93 : vector<8x128xf32>
    %95 = vector.extract_strided_slice %5 {offsets = [6, 0], sizes = [1, 128], strides = [1, 1]} : vector<8x128xf32> to vector<1x128xf32>
    %96 = vector.broadcast %95 : vector<1x128xf32> to vector<8x128xf32>
    %97 = arith.subf %96, %3 : vector<8x128xf32>
    %cst_25 = arith.constant 0.000000e+00 : f32
    %98 = vector.broadcast %cst_25 : f32 to vector<8x128xf32>
    %99 = arith.maximumf %97, %98 : vector<8x128xf32>
    %100 = arith.mulf %94, %99 : vector<8x128xf32>
    %101 = arith.mulf %100, %100 : vector<8x128xf32>
    %102 = arith.truncf %101 : vector<8x128xf32> to vector<8x128xbf16>
    %c0_26 = arith.constant 0 : index
    %c768 = arith.constant 768 : index
    %103 = vector.load %arg10[%c0_26, %c768] : memref<8x1024xbf16, #tpu.memory_space<vmem>>, vector<8x128xbf16>
    tpu.vector_store %arg10[%c0_26, %c768], %102 {strides = array<i32>} : memref<8x1024xbf16, #tpu.memory_space<vmem>>, vector<8x128xbf16>,
    %104 = vector.extract_strided_slice %4 {offsets = [7, 0], sizes = [1, 128], strides = [1, 1]} : vector<8x128xf32> to vector<1x128xf32>
    %105 = vector.broadcast %104 : vector<1x128xf32> to vector<8x128xf32>
    %106 = arith.subf %3, %105 : vector<8x128xf32>
    %cst_27 = arith.constant 0.000000e+00 : f32
    %107 = vector.broadcast %cst_27 : f32 to vector<8x128xf32>
    %108 = arith.maximumf %106, %107 : vector<8x128xf32>
    %109 = vector.extract_strided_slice %5 {offsets = [7, 0], sizes = [1, 128], strides = [1, 1]} : vector<8x128xf32> to vector<1x128xf32>
    %110 = vector.broadcast %109 : vector<1x128xf32> to vector<8x128xf32>
    %111 = arith.subf %110, %3 : vector<8x128xf32>
    %cst_28 = arith.constant 0.000000e+00 : f32
    %112 = vector.broadcast %cst_28 : f32 to vector<8x128xf32>
    %113 = arith.maximumf %111, %112 : vector<8x128xf32>
    %114 = arith.mulf %108, %113 : vector<8x128xf32>
    %115 = arith.mulf %114, %114 : vector<8x128xf32>
    %116 = arith.truncf %115 : vector<8x128xf32> to vector<8x128xbf16>
    %c0_29 = arith.constant 0 : index
    %c896 = arith.constant 896 : index
    %117 = vector.load %arg10[%c0_29, %c896] : memref<8x1024xbf16, #tpu.memory_space<vmem>>, vector<8x128xbf16>
    tpu.vector_store %arg10[%c0_29, %c896], %116 {strides = array<i32>} : memref<8x1024xbf16, #tpu.memory_space<vmem>>, vector<8x128xbf16>,
    %c0_30 = arith.constant 0 : index
    %c0_31 = arith.constant 0 : index
    %118 = vector.load %arg9[%c0_30, %c0_31] : memref<8x128xf32, #tpu.memory_space<vmem>>, vector<8x128xf32>
    %c0_32 = arith.constant 0 : index
    %c0_33 = arith.constant 0 : index
    %119 = vector.load %arg10[%c0_32, %c0_33] : memref<8x1024xbf16, #tpu.memory_space<vmem>>, vector<8x1024xbf16>
    %c0_34 = arith.constant 0 : index
    %c0_35 = arith.constant 0 : index
    %120 = vector.load %arg6[%c0_34, %c0_35] : memref<1024x128xbf16, #tpu.memory_space<vmem>>, vector<1024x128xbf16>
    %cst_36 = arith.constant dense<0.000000e+00> : vector<8x128xf32>
    %121 = tpu.matmul %119, %120, %cst_36 {dimension_numbers = #tpu.dot_dimension_numbers<[1], [0], [0], [1], [0, 0, 1, 1], [], []>} : vector<8x1024xbf16>, vector<1024x128xbf16>, vector<8x128xf32> -> vector<8x128xf32>
    %122 = arith.addf %118, %121 : vector<8x128xf32>
    %c0_37 = arith.constant 0 : index
    %c0_38 = arith.constant 0 : index
    %123 = vector.load %arg9[%c0_37, %c0_38] : memref<8x128xf32, #tpu.memory_space<vmem>>, vector<8x128xf32>
    tpu.vector_store %arg9[%c0_37, %c0_38], %122 {strides = array<i32>} : memref<8x128xf32, #tpu.memory_space<vmem>>, vector<8x128xf32>,
    %c0_i32_39 = arith.constant 0 : i32
    %124 = arith.cmpi eq, %arg2, %c0_i32_39 : i32
    %125 = arith.extui %124 : i1 to i32
    %c0_i32_40 = arith.constant 0 : i32
    %126 = arith.cmpi ne, %125, %c0_i32_40 : i32
    scf.if %126 {
      %c0_41 = arith.constant 0 : index
      %c0_42 = arith.constant 0 : index
      %127 = vector.load %arg9[%c0_41, %c0_42] : memref<8x128xf32, #tpu.memory_space<vmem>>, vector<8x128xf32>
      %c0_43 = arith.constant 0 : index
      %c0_44 = arith.constant 0 : index
      %128 = vector.load %arg8[%c0_43, %c0_44] : memref<8x128xf32, #tpu.memory_space<vmem>>, vector<8x128xf32>
      tpu.vector_store %arg8[%c0_43, %c0_44], %127 {strides = array<i32>} : memref<8x128xf32, #tpu.memory_space<vmem>>, vector<8x128xf32>,
    } else {
    }
    return
  }
  func.func @transform_0(%arg0: i32, %arg1: i32, %arg2: i32) -> (i32, i32) {
    %c0_i32 = arith.constant 0 : i32
    return %arg0, %arg2 : i32, i32
  }
  func.func @transform_1(%arg0: i32, %arg1: i32, %arg2: i32) -> (i32, i32) {
    %c0_i32 = arith.constant 0 : i32
    %c0_i32_0 = arith.constant 0 : i32
    return %c0_i32, %arg2 : i32, i32
  }
  func.func @transform_2(%arg0: i32, %arg1: i32, %arg2: i32) -> (i32, i32) {
    %c0_i32 = arith.constant 0 : i32
    %c0_i32_0 = arith.constant 0 : i32
    return %c0_i32, %arg2 : i32, i32
  }
  func.func @transform_3(%arg0: i32, %arg1: i32, %arg2: i32) -> (i32, i32) {
    %c0_i32 = arith.constant 0 : i32
    return %arg2, %arg1 : i32, i32
  }
  func.func @transform_4(%arg0: i32, %arg1: i32, %arg2: i32) -> (i32, i32) {
    %c0_i32 = arith.constant 0 : i32
    %c0_i32_0 = arith.constant 0 : i32
    return %c0_i32, %arg1 : i32, i32
  }
  func.func @transform_5(%arg0: i32, %arg1: i32, %arg2: i32) -> (i32, i32) {
    %c0_i32 = arith.constant 0 : i32
    return %arg0, %arg1 : i32, i32
  }
}

</mosaic_0001>

<llo_original>
// kernel: tpu_custom_call.1
$region0: #{tpu_custom_call.1}
  #allocation0 [shape = 'u32[]', space=smem, size = 0x4, offset = 0x4, fixed_abs, tag = 'smem constant byte address 0x4 - core index']
  #allocation1 [shape = 'u32[72,128]{1,0:T(1,128)}', space=vmem, size = 0x9000, scoped, tag = 'internal scratch']
  #allocation2 [shape = 'f32[8,128]{1,0:T(8,128)}', space=vmem, size = 0x1000, scoped, tag = 'scratch operand']
  #allocation3 [shape = 'bf16[8,1024]{1,0:T(8,128)(2,1)}', space=vmem, size = 0x4000, scoped, tag = 'scratch operand']
  %s0 = inlined_call_operand.hbm [shape: f32[8,128], index: 0, kind: input, shape index: {}]
  %s1 = inlined_call_operand.hbm [shape: f32[8,128], index: 1, kind: input, shape index: {}]
  %s2 = inlined_call_operand.hbm [shape: f32[8,128], index: 2, kind: input, shape index: {}]
  %s3 = inlined_call_operand.hbm [shape: bf16[1024,128], index: 3, kind: input, shape index: {}]
  %s4 = inlined_call_operand.vmem [shape: f32[1,128], index: 4, kind: input, shape index: {}]
  %s5 = inlined_call_operand.hbm [shape: f32[8,128], index: 5, kind: output, shape index: {}]
  %s6 = sld [smem:[#allocation0]]
  $region54: #{tpu_custom_call.1} parent=0
    _
  %s8 = ssub.s32 1, %s6
  %s9 = scalar_select 0, %s8, %s6
  $region1: #{tpu_custom_call.1} parent=0
    #allocation4 [shape = 'u8[4096]{0}', space=vmem, size = 0x1000, scoped, tag = 'input window, operand 0, single buffered']
    #allocation5 [shape = 's32[1]{0}', space=sflag, size = 0x4, scoped, tag = 'scoped memory for tpu_custom_call.1']
    #allocation6 [shape = 's32[1]{0}', space=sflag, size = 0x4, scoped, tag = 'scoped memory for tpu_custom_call.1']
    #allocation7 [shape = 'u8[4096]{0}', space=vmem, size = 0x1000, scoped, tag = 'input window, operand 1, single buffered']
    #allocation8 [shape = 's32[1]{0}', space=sflag, size = 0x4, scoped, tag = 'scoped memory for tpu_custom_call.1']
    #allocation9 [shape = 'u8[4096]{0}', space=vmem, size = 0x1000, scoped, tag = 'input window, operand 2, single buffered']
    #allocation10 [shape = 'u8[262144]{0}', space=vmem, size = 0x40000, scoped, tag = 'input window, operand 3, single buffered']
    #allocation11 [shape = 's32[1]{0}', space=sflag, size = 0x4, scoped, tag = 'scoped memory for tpu_custom_call.1']
    #allocation12 [shape = 'u8[4096]{0}', space=vmem, size = 0x1000, scoped, tag = 'output window, operand 0, single buffered']
    %10 = vsyncpa [#allocation5], 0
    %11 = vsyncpa [#allocation8], 0
    %12 = vsyncpa [#allocation11], 0
    %13 = vsyncpa [#allocation6], 0
    // Predicated region
    $region2: #{tpu_custom_call.1} parent=1 // pred_check
      _
    $region3: #{tpu_custom_call.1} parent=1 // pred_check_branch
      %15 = sbr.rel (0) target = $region5
    $region4: #{tpu_custom_call.1} parent=1 // pred_region
      %17 = vsyncadd [#allocation5], 0
      %s19 = sshll.u32 %s0, 4
      %s20 = int_to_ptr.hbm [resolvable:$true] %s19
      %s21 = sshll.u32 [#allocation4], 4
      %s22 = int_to_ptr.vmem [resolvable:$true] %s21
      %24 = dma.hbm_to_vmem [thread:$0]  %s20, 128, %s22, [#allocation5]
    $region5: #{tpu_custom_call.1} parent=1 // pred_fallthru
      _
    // Predicated region
    $region6: #{tpu_custom_call.1} parent=1 // pred_check
      _
    $region7: #{tpu_custom_call.1} parent=1 // pred_check_branch
      %26 = sbr.rel (0) target = $region9
    $region8: #{tpu_custom_call.1} parent=1 // pred_region
      %28 = vsyncadd [#allocation8], 0
      %s30 = sshll.u32 %s1, 4
      %s31 = int_to_ptr.hbm [resolvable:$true] %s30
      %s32 = sshll.u32 [#allocation7], 4
      %s33 = int_to_ptr.vmem [resolvable:$true] %s32
      %35 = dma.hbm_to_vmem [thread:$0]  %s31, 128, %s33, [#allocation8]
    $region9: #{tpu_custom_call.1} parent=1 // pred_fallthru
      _
    // Predicated region
    $region10: #{tpu_custom_call.1} parent=1 // pred_check
      _
    $region11: #{tpu_custom_call.1} parent=1 // pred_check_branch
      %37 = sbr.rel (0) target = $region13
    $region12: #{tpu_custom_call.1} parent=1 // pred_region
      %39 = vsyncadd [#allocation8], 0
      %s41 = sshll.u32 %s2, 4
      %s42 = int_to_ptr.hbm [resolvable:$true] %s41
      %s43 = sshll.u32 [#allocation9], 4
      %s44 = int_to_ptr.vmem [resolvable:$true] %s43
      %46 = dma.hbm_to_vmem [thread:$0]  %s42, 128, %s44, [#allocation8]
    $region13: #{tpu_custom_call.1} parent=1 // pred_fallthru
      _
    // Predicated region
    $region14: #{tpu_custom_call.1} parent=1 // pred_check
      _
    $region15: #{tpu_custom_call.1} parent=1 // pred_check_branch
      %48 = sbr.rel (0) target = $region17
    $region16: #{tpu_custom_call.1} parent=1 // pred_region
      %50 = vsyncadd [#allocation11], 0
      %s51 = sshll.u32 %s3, 4
      %s52 = int_to_ptr.hbm [resolvable:$true] %s51
      %s53 = sshll.u32 [#allocation10], 4
      %s54 = int_to_ptr.vmem [resolvable:$true] %s53
      %59 = dma.hbm_to_vmem [thread:$0]  %s52, 8192, %s54, [#allocation11], 64, 64, 4
    $region17: #{tpu_custom_call.1} parent=1 // pred_fallthru
      _
    // Predicated region
    $region18: #{tpu_custom_call.1} parent=1 // pred_check
      _
    $region19: #{tpu_custom_call.1} parent=1 // pred_check_branch
      %61 = sbr.rel (0) target = $region21
    $region20: #{tpu_custom_call.1} parent=1 // pred_region
      _
    $region21: #{tpu_custom_call.1} parent=1 // pred_fallthru
      _
    // Predicated region
    $region22: #{tpu_custom_call.1} parent=1 // pred_check
      _
    $region23: #{tpu_custom_call.1} parent=1 // pred_check_branch
      %63 = sbr.rel (0) target = $region25
    $region24: #{tpu_custom_call.1} parent=1 // pred_region
      %65 = dma.done [#allocation5], 128
    $region25: #{tpu_custom_call.1} parent=1 // pred_fallthru
      _
    // Predicated region
    $region26: #{tpu_custom_call.1} parent=1 // pred_check
      _
    $region27: #{tpu_custom_call.1} parent=1 // pred_check_branch
      %67 = sbr.rel (0) target = $region29
    $region28: #{tpu_custom_call.1} parent=1 // pred_region
      %69 = dma.done [#allocation8], 128
    $region29: #{tpu_custom_call.1} parent=1 // pred_fallthru
      _
    // Predicated region
    $region30: #{tpu_custom_call.1} parent=1 // pred_check
      _
    $region31: #{tpu_custom_call.1} parent=1 // pred_check_branch
      %71 = sbr.rel (0) target = $region33
    $region32: #{tpu_custom_call.1} parent=1 // pred_region
      %73 = dma.done [#allocation8], 128
    $region33: #{tpu_custom_call.1} parent=1 // pred_fallthru
      _
    // Predicated region
    $region34: #{tpu_custom_call.1} parent=1 // pred_check
      _
    $region35: #{tpu_custom_call.1} parent=1 // pred_check_branch
      %75 = sbr.rel (0) target = $region37
    $region36: #{tpu_custom_call.1} parent=1 // pred_region
      %77 = dma.done [#allocation11], 8192
    $region37: #{tpu_custom_call.1} parent=1 // pred_fallthru
      _
    %p78 = scmp.eq.s32.totalorder 0, 0
    // Predicated region
    $region38: #{tpu_custom_call.1} parent=1 // pred_check
      %p79 = pneg %p78
    $region39: #{tpu_custom_call.1} parent=1 // pred_check_branch
      %81 = sbr.rel (%p79) target = $region41
    $region40: #{tpu_custom_call.1} parent=1 // pred_region
      %v82 = vld [vmem:[%s4] sm:$0x1]
      %v84 = vperm.slane %v82, 0
      %86 = vst [vmem:[#allocation2] sm:$0xff] %v84
    $region41: #{tpu_custom_call.1} parent=1 // pred_fallthru
      _
    %v87 = vld [vmem:[#allocation4] sm:$0xff]
    %v88 = vld [vmem:[#allocation7] sm:$0xff]
    %v89 = vld [vmem:[#allocation9] sm:$0xff]
    %v90 = vperm.slane %v88, 0
    %v91 = vsub.f32 %v87, %v90
    %v92 = vmax.f32 %v91, 0.0
    %v93 = vperm.slane %v89, 0
    %v94 = vsub.f32 %v93, %v87
    %v95 = vmax.f32 %v94, 0.0
    %v96 = vmul.f32 %v92, %v95
    %v97 = vmul.f32 %v96, %v96
    %v98 = vpack.c.bf16 %v97, %v97
    %99 = vst [vmem:[#allocation3] sm:$0xf] %v98
    %v100 = vperm.slane %v88, 1
    %v101 = vsub.f32 %v87, %v100
    %v102 = vmax.f32 %v101, 0.0
    %v103 = vperm.slane %v89, 1
    %v104 = vsub.f32 %v103, %v87
    %v105 = vmax.f32 %v104, 0.0
    %v106 = vmul.f32 %v102, %v105
    %v107 = vmul.f32 %v106, %v106
    %v108 = vpack.c.bf16 %v107, %v107
    %109 = vst [vmem:[#allocation3 + $0x4] sm:$0xf] %v108
    %v110 = vperm.slane %v88, 2
    %v111 = vsub.f32 %v87, %v110
    %v112 = vmax.f32 %v111, 0.0
    %v113 = vperm.slane %v89, 2
    %v114 = vsub.f32 %v113, %v87
    %v115 = vmax.f32 %v114, 0.0
    %v116 = vmul.f32 %v112, %v115
    %v117 = vmul.f32 %v116, %v116
    %v118 = vpack.c.bf16 %v117, %v117
    %119 = vst [vmem:[#allocation3 + $0x8] sm:$0xf] %v118
    %v120 = vperm.slane %v88, 3
    %v121 = vsub.f32 %v87, %v120
    %v122 = vmax.f32 %v121, 0.0
    %v123 = vperm.slane %v89, 3
    %v124 = vsub.f32 %v123, %v87
    %v125 = vmax.f32 %v124, 0.0
    %v126 = vmul.f32 %v122, %v125
    %v127 = vmul.f32 %v126, %v126
    %v128 = vpack.c.bf16 %v127, %v127
    %129 = vst [vmem:[#allocation3 + $0xc] sm:$0xf] %v128
    %v130 = vperm.slane %v88, 4
    %v131 = vsub.f32 %v87, %v130
    %v132 = vmax.f32 %v131, 0.0
    %v133 = vperm.slane %v89, 4
    %v134 = vsub.f32 %v133, %v87
    %v135 = vmax.f32 %v134, 0.0
    %v136 = vmul.f32 %v132, %v135
    %v137 = vmul.f32 %v136, %v136
    %v138 = vpack.c.bf16 %v137, %v137
    %139 = vst [vmem:[#allocation3 + $0x10] sm:$0xf] %v138
    %v140 = vperm.slane %v88, 5
    %v141 = vsub.f32 %v87, %v140
    %v142 = vmax.f32 %v141, 0.0
    %v143 = vperm.slane %v89, 5
    %v144 = vsub.f32 %v143, %v87
    %v145 = vmax.f32 %v144, 0.0
    %v146 = vmul.f32 %v142, %v145
    %v147 = vmul.f32 %v146, %v146
    %v148 = vpack.c.bf16 %v147, %v147
    %149 = vst [vmem:[#allocation3 + $0x14] sm:$0xf] %v148
    %v150 = vperm.slane %v88, 6
    %v151 = vsub.f32 %v87, %v150
    %v152 = vmax.f32 %v151, 0.0
    %v153 = vperm.slane %v89, 6
    %v154 = vsub.f32 %v153, %v87
    %v155 = vmax.f32 %v154, 0.0
    %v156 = vmul.f32 %v152, %v155
    %v157 = vmul.f32 %v156, %v156
    %v158 = vpack.c.bf16 %v157, %v157
    %159 = vst [vmem:[#allocation3 + $0x18] sm:$0xf] %v158
    %v160 = vperm.slane %v88, 7
    %v161 = vsub.f32 %v87, %v160
    %v162 = vmax.f32 %v161, 0.0
    %v163 = vperm.slane %v89, 7
    %v164 = vsub.f32 %v163, %v87
    %v165 = vmax.f32 %v164, 0.0
    %v166 = vmul.f32 %v162, %v165
    %v167 = vmul.f32 %v166, %v166
    %v168 = vpack.c.bf16 %v167, %v167
    %169 = vst [vmem:[#allocation3 + $0x1c] sm:$0xf] %v168
    %v170 = vld [vmem:[#allocation2] sm:$0xff]
    %v171 = vld [vmem:[#allocation3] sm:$0xff]
    %v172 = vld [vmem:[#allocation3 + $0x8] sm:$0xff]
    %v173 = vld [vmem:[#allocation3 + $0x10] sm:$0xff]
    %v174 = vld [vmem:[#allocation3 + $0x18] sm:$0xff]
    %v175 = vld [vmem:[#allocation10] sm:$0xf]
    %v176 = vld [vmem:[#allocation10 + $0x4] sm:$0xf]
    %v177 = vld [vmem:[#allocation10 + $0x8] sm:$0xf]
    %v178 = vld [vmem:[#allocation10 + $0xc] sm:$0xf]
    %v179 = vld [vmem:[#allocation10 + $0x10] sm:$0xf]
    %v180 = vld [vmem:[#allocation10 + $0x14] sm:$0xf]
    %v181 = vld [vmem:[#allocation10 + $0x18] sm:$0xf]
    %v182 = vld [vmem:[#allocation10 + $0x1c] sm:$0xf]
    %v183 = vld [vmem:[#allocation10 + $0x20] sm:$0xf]
    %v184 = vld [vmem:[#allocation10 + $0x24] sm:$0xf]
    %v185 = vld [vmem:[#allocation10 + $0x28] sm:$0xf]
    %v186 = vld [vmem:[#allocation10 + $0x2c] sm:$0xf]
    %v187 = vld [vmem:[#allocation10 + $0x30] sm:$0xf]
    %v188 = vld [vmem:[#allocation10 + $0x34] sm:$0xf]
    %v189 = vld [vmem:[#allocation10 + $0x38] sm:$0xf]
    %v190 = vld [vmem:[#allocation10 + $0x3c] sm:$0xf]
    %v191 = vld [vmem:[#allocation10 + $0x40] sm:$0xf]
    %v192 = vld [vmem:[#allocation10 + $0x44] sm:$0xf]
    %v193 = vld [vmem:[#allocation10 + $0x48] sm:$0xf]
    %v194 = vld [vmem:[#allocation10 + $0x4c] sm:$0xf]
    %v195 = vld [vmem:[#allocation10 + $0x50] sm:$0xf]
    %v196 = vld [vmem:[#allocation10 + $0x54] sm:$0xf]
    %v197 = vld [vmem:[#allocation10 + $0x58] sm:$0xf]
    %v198 = vld [vmem:[#allocation10 + $0x5c] sm:$0xf]
    %v199 = vld [vmem:[#allocation10 + $0x60] sm:$0xf]
    %v200 = vld [vmem:[#allocation10 + $0x64] sm:$0xf]
    %v201 = vld [vmem:[#allocation10 + $0x68] sm:$0xf]
    %v202 = vld [vmem:[#allocation10 + $0x6c] sm:$0xf]
    %v203 = vld [vmem:[#allocation10 + $0x70] sm:$0xf]
    %v204 = vld [vmem:[#allocation10 + $0x74] sm:$0xf]
    %v205 = vld [vmem:[#allocation10 + $0x78] sm:$0xf]
    %v206 = vld [vmem:[#allocation10 + $0x7c] sm:$0xf]
    %v207 = vld [vmem:[#allocation10 + $0x80] sm:$0xf]
    %v208 = vld [vmem:[#allocation10 + $0x84] sm:$0xf]
    %v209 = vld [vmem:[#allocation10 + $0x88] sm:$0xf]
    %v210 = vld [vmem:[#allocation10 + $0x8c] sm:$0xf]
    %v211 = vld [vmem:[#allocation10 + $0x90] sm:$0xf]
    %v212 = vld [vmem:[#allocation10 + $0x94] sm:$0xf]
    %v213 = vld [vmem:[#allocation10 + $0x98] sm:$0xf]
    %v214 = vld [vmem:[#allocation10 + $0x9c] sm:$0xf]
    %v215 = vld [vmem:[#allocation10 + $0xa0] sm:$0xf]
    %v216 = vld [vmem:[#allocation10 + $0xa4] sm:$0xf]
    %v217 = vld [vmem:[#allocation10 + $0xa8] sm:$0xf]
    %v218 = vld [vmem:[#allocation10 + $0xac] sm:$0xf]
    %v219 = vld [vmem:[#allocation10 + $0xb0] sm:$0xf]
    %v220 = vld [vmem:[#allocation10 + $0xb4] sm:$0xf]
    %v221 = vld [vmem:[#allocation10 + $0xb8] sm:$0xf]
    %v222 = vld [vmem:[#allocation10 + $0xbc] sm:$0xf]
    %v223 = vld [vmem:[#allocation10 + $0xc0] sm:$0xf]
    %v224 = vld [vmem:[#allocation10 + $0xc4] sm:$0xf]
    %v225 = vld [vmem:[#allocation10 + $0xc8] sm:$0xf]
    %v226 = vld [vmem:[#allocation10 + $0xcc] sm:$0xf]
    %v227 = vld [vmem:[#allocation10 + $0xd0] sm:$0xf]
    %v228 = vld [vmem:[#allocation10 + $0xd4] sm:$0xf]
    %v229 = vld [vmem:[#allocation10 + $0xd8] sm:$0xf]
    %v230 = vld [vmem:[#allocation10 + $0xdc] sm:$0xf]
    %v231 = vld [vmem:[#allocation10 + $0xe0] sm:$0xf]
    %v232 = vld [vmem:[#allocation10 + $0xe4] sm:$0xf]
    %v233 = vld [vmem:[#allocation10 + $0xe8] sm:$0xf]
    %v234 = vld [vmem:[#allocation10 + $0xec] sm:$0xf]
    %v235 = vld [vmem:[#allocation10 + $0xf0] sm:$0xf]
    %v236 = vld [vmem:[#allocation10 + $0xf4] sm:$0xf]
    %v237 = vld [vmem:[#allocation10 + $0xf8] sm:$0xf]
    %v238 = vld [vmem:[#allocation10 + $0xfc] sm:$0xf]
    %v239 = vld [vmem:[#allocation10 + $0x100] sm:$0xf]
    %v240 = vld [vmem:[#allocation10 + $0x104] sm:$0xf]
    %v241 = vld [vmem:[#allocation10 + $0x108] sm:$0xf]
    %v242 = vld [vmem:[#allocation10 + $0x10c] sm:$0xf]
    %v243 = vld [vmem:[#allocation10 + $0x110] sm:$0xf]
    %v244 = vld [vmem:[#allocation10 + $0x114] sm:$0xf]
    %v245 = vld [vmem:[#allocation10 + $0x118] sm:$0xf]
    %v246 = vld [vmem:[#allocation10 + $0x11c] sm:$0xf]
    %v247 = vld [vmem:[#allocation10 + $0x120] sm:$0xf]
    %v248 = vld [vmem:[#allocation10 + $0x124] sm:$0xf]
    %v249 = vld [vmem:[#allocation10 + $0x128] sm:$0xf]
    %v250 = vld [vmem:[#allocation10 + $0x12c] sm:$0xf]
    %v251 = vld [vmem:[#allocation10 + $0x130] sm:$0xf]
    %v252 = vld [vmem:[#allocation10 + $0x134] sm:$0xf]
    %v253 = vld [vmem:[#allocation10 + $0x138] sm:$0xf]
    %v254 = vld [vmem:[#allocation10 + $0x13c] sm:$0xf]
    %v255 = vld [vmem:[#allocation10 + $0x140] sm:$0xf]
    %v256 = vld [vmem:[#allocation10 + $0x144] sm:$0xf]
    %v257 = vld [vmem:[#allocation10 + $0x148] sm:$0xf]
    %v258 = vld [vmem:[#allocation10 + $0x14c] sm:$0xf]
    %v259 = vld [vmem:[#allocation10 + $0x150] sm:$0xf]
    %v260 = vld [vmem:[#allocation10 + $0x154] sm:$0xf]
    %v261 = vld [vmem:[#allocation10 + $0x158] sm:$0xf]
    %v262 = vld [vmem:[#allocation10 + $0x15c] sm:$0xf]
    %v263 = vld [vmem:[#allocation10 + $0x160] sm:$0xf]
    %v264 = vld [vmem:[#allocation10 + $0x164] sm:$0xf]
    %v265 = vld [vmem:[#allocation10 + $0x168] sm:$0xf]
    %v266 = vld [vmem:[#allocation10 + $0x16c] sm:$0xf]
    %v267 = vld [vmem:[#allocation10 + $0x170] sm:$0xf]
    %v268 = vld [vmem:[#allocation10 + $0x174] sm:$0xf]
    %v269 = vld [vmem:[#allocation10 + $0x178] sm:$0xf]
    %v270 = vld [vmem:[#allocation10 + $0x17c] sm:$0xf]
    %v271 = vld [vmem:[#allocation10 + $0x180] sm:$0xf]
    %v272 = vld [vmem:[#allocation10 + $0x184] sm:$0xf]
    %v273 = vld [vmem:[#allocation10 + $0x188] sm:$0xf]
    %v274 = vld [vmem:[#allocation10 + $0x18c] sm:$0xf]
    %v275 = vld [vmem:[#allocation10 + $0x190] sm:$0xf]
    %v276 = vld [vmem:[#allocation10 + $0x194] sm:$0xf]
    %v277 = vld [vmem:[#allocation10 + $0x198] sm:$0xf]
    %v278 = vld [vmem:[#allocation10 + $0x19c] sm:$0xf]
    %v279 = vld [vmem:[#allocation10 + $0x1a0] sm:$0xf]
    %v280 = vld [vmem:[#allocation10 + $0x1a4] sm:$0xf]
    %v281 = vld [vmem:[#allocation10 + $0x1a8] sm:$0xf]
    %v282 = vld [vmem:[#allocation10 + $0x1ac] sm:$0xf]
    %v283 = vld [vmem:[#allocation10 + $0x1b0] sm:$0xf]
    %v284 = vld [vmem:[#allocation10 + $0x1b4] sm:$0xf]
    %v285 = vld [vmem:[#allocation10 + $0x1b8] sm:$0xf]
    %v286 = vld [vmem:[#allocation10 + $0x1bc] sm:$0xf]
    %v287 = vld [vmem:[#allocation10 + $0x1c0] sm:$0xf]
    %v288 = vld [vmem:[#allocation10 + $0x1c4] sm:$0xf]
    %v289 = vld [vmem:[#allocation10 + $0x1c8] sm:$0xf]
    %v290 = vld [vmem:[#allocation10 + $0x1cc] sm:$0xf]
    %v291 = vld [vmem:[#allocation10 + $0x1d0] sm:$0xf]
    %v292 = vld [vmem:[#allocation10 + $0x1d4] sm:$0xf]
    %v293 = vld [vmem:[#allocation10 + $0x1d8] sm:$0xf]
    %v294 = vld [vmem:[#allocation10 + $0x1dc] sm:$0xf]
    %v295 = vld [vmem:[#allocation10 + $0x1e0] sm:$0xf]
    %v296 = vld [vmem:[#allocation10 + $0x1e4] sm:$0xf]
    %v297 = vld [vmem:[#allocation10 + $0x1e8] sm:$0xf]
    %v298 = vld [vmem:[#allocation10 + $0x1ec] sm:$0xf]
    %v299 = vld [vmem:[#allocation10 + $0x1f0] sm:$0xf]
    %v300 = vld [vmem:[#allocation10 + $0x1f4] sm:$0xf]
    %v301 = vld [vmem:[#allocation10 + $0x1f8] sm:$0xf]
    %v302 = vld [vmem:[#allocation10 + $0x1fc] sm:$0xf]
    %v307 = vunpack.c.l.b16 %v171
    %v308 = vunpack.c.h.b16 %v171
    %v309 = vunpack.c.l.b16 %v172
    %v310 = vunpack.c.h.b16 %v172
    %v311 = vunpack.c.l.b16 %v173
    %v312 = vunpack.c.h.b16 %v173
    %v313 = vunpack.c.l.b16 %v174
    %v314 = vunpack.c.h.b16 %v174
    %v315 = vpack.c.b16 %v307, %v307
    %v316 = vpack.c.b16 %v308, %v308
    %v317 = vpack.c.b16 %v309, %v309
    %v318 = vpack.c.b16 %v310, %v310
    %v319 = vpack.c.b16 %v311, %v311
    %v320 = vpack.c.b16 %v312, %v312
    %v321 = vpack.c.b16 %v313, %v313
    %v322 = vpack.c.b16 %v314, %v314
    %v459 = vunpack.c.l.b16 %v175
    %v460 = vunpack.c.l.b16 %v176
    %v461 = vunpack.c.l.b16 %v177
    %v462 = vunpack.c.l.b16 %v178
    %v463 = vunpack.c.l.b16 %v179
    %v464 = vunpack.c.l.b16 %v180
    %v465 = vunpack.c.l.b16 %v181
    %v466 = vunpack.c.l.b16 %v182
    %v467 = vunpack.c.l.b16 %v183
    %v468 = vunpack.c.l.b16 %v184
    %v469 = vunpack.c.l.b16 %v185
    %v470 = vunpack.c.l.b16 %v186
    %v471 = vunpack.c.l.b16 %v187
    %v472 = vunpack.c.l.b16 %v188
    %v473 = vunpack.c.l.b16 %v189
    %v474 = vunpack.c.l.b16 %v190
    %v475 = vunpack.c.l.b16 %v191
    %v476 = vunpack.c.l.b16 %v192
    %v477 = vunpack.c.l.b16 %v193
    %v478 = vunpack.c.l.b16 %v194
    %v479 = vunpack.c.l.b16 %v195
    %v480 = vunpack.c.l.b16 %v196
    %v481 = vunpack.c.l.b16 %v197
    %v482 = vunpack.c.l.b16 %v198
    %v483 = vunpack.c.l.b16 %v199
    %v484 = vunpack.c.l.b16 %v200
    %v485 = vunpack.c.l.b16 %v201
    %v486 = vunpack.c.l.b16 %v202
    %v487 = vunpack.c.l.b16 %v203
    %v488 = vunpack.c.l.b16 %v204
    %v489 = vunpack.c.l.b16 %v205
    %v490 = vunpack.c.l.b16 %v206
    %v491 = vunpack.c.l.b16 %v207
    %v492 = vunpack.c.l.b16 %v208
    %v493 = vunpack.c.l.b16 %v209
    %v494 = vunpack.c.l.b16 %v210
    %v495 = vunpack.c.l.b16 %v211
    %v496 = vunpack.c.l.b16 %v212
    %v497 = vunpack.c.l.b16 %v213
    %v498 = vunpack.c.l.b16 %v214
    %v499 = vunpack.c.l.b16 %v215
    %v500 = vunpack.c.l.b16 %v216
    %v501 = vunpack.c.l.b16 %v217
    %v502 = vunpack.c.l.b16 %v218
    %v503 = vunpack.c.l.b16 %v219
    %v504 = vunpack.c.l.b16 %v220
    %v505 = vunpack.c.l.b16 %v221
    %v506 = vunpack.c.l.b16 %v222
    %v507 = vunpack.c.l.b16 %v223
    %v508 = vunpack.c.l.b16 %v224
    %v509 = vunpack.c.l.b16 %v225
    %v510 = vunpack.c.l.b16 %v226
    %v511 = vunpack.c.l.b16 %v227
    %v512 = vunpack.c.l.b16 %v228
    %v513 = vunpack.c.l.b16 %v229
    %v514 = vunpack.c.l.b16 %v230
    %v515 = vunpack.c.l.b16 %v231
    %v516 = vunpack.c.l.b16 %v232
    %v517 = vunpack.c.l.b16 %v233
    %v518 = vunpack.c.l.b16 %v234
    %v519 = vunpack.c.l.b16 %v235
    %v520 = vunpack.c.l.b16 %v236
    %v521 = vunpack.c.l.b16 %v237
    %v522 = vunpack.c.l.b16 %v238
    %v523 = vunpack.c.l.b16 %v239
    %v524 = vunpack.c.l.b16 %v240
    %v525 = vunpack.c.l.b16 %v241
    %v526 = vunpack.c.l.b16 %v242
    %v527 = vunpack.c.l.b16 %v243
    %v528 = vunpack.c.l.b16 %v244
    %v529 = vunpack.c.l.b16 %v245
    %v530 = vunpack.c.l.b16 %v246
    %v531 = vunpack.c.l.b16 %v247
    %v532 = vunpack.c.l.b16 %v248
    %v533 = vunpack.c.l.b16 %v249
    %v534 = vunpack.c.l.b16 %v250
    %v535 = vunpack.c.l.b16 %v251
    %v536 = vunpack.c.l.b16 %v252
    %v537 = vunpack.c.l.b16 %v253
    %v538 = vunpack.c.l.b16 %v254
    %v539 = vunpack.c.l.b16 %v255
    %v540 = vunpack.c.l.b16 %v256
    %v541 = vunpack.c.l.b16 %v257
    %v542 = vunpack.c.l.b16 %v258
    %v543 = vunpack.c.l.b16 %v259
    %v544 = vunpack.c.l.b16 %v260
    %v545 = vunpack.c.l.b16 %v261
    %v546 = vunpack.c.l.b16 %v262
    %v547 = vunpack.c.l.b16 %v263
    %v548 = vunpack.c.l.b16 %v264
    %v549 = vunpack.c.l.b16 %v265
    %v550 = vunpack.c.l.b16 %v266
    %v551 = vunpack.c.l.b16 %v267
    %v552 = vunpack.c.l.b16 %v268
    %v553 = vunpack.c.l.b16 %v269
    %v554 = vunpack.c.l.b16 %v270
    %v555 = vunpack.c.l.b16 %v271
    %v556 = vunpack.c.l.b16 %v272
    %v557 = vunpack.c.l.b16 %v273
    %v558 = vunpack.c.l.b16 %v274
    %v559 = vunpack.c.l.b16 %v275
    %v560 = vunpack.c.l.b16 %v276
    %v561 = vunpack.c.l.b16 %v277
    %v562 = vunpack.c.l.b16 %v278
    %v563 = vunpack.c.l.b16 %v279
    %v564 = vunpack.c.l.b16 %v280
    %v565 = vunpack.c.l.b16 %v281
    %v566 = vunpack.c.l.b16 %v282
    %v567 = vunpack.c.l.b16 %v283
    %v568 = vunpack.c.l.b16 %v284
    %v569 = vunpack.c.l.b16 %v285
    %v570 = vunpack.c.l.b16 %v286
    %v571 = vunpack.c.l.b16 %v287
    %v572 = vunpack.c.l.b16 %v288
    %v573 = vunpack.c.l.b16 %v289
    %v574 = vunpack.c.l.b16 %v290
    %v575 = vunpack.c.l.b16 %v291
    %v576 = vunpack.c.l.b16 %v292
    %v577 = vunpack.c.l.b16 %v293
    %v578 = vunpack.c.l.b16 %v294
    %v579 = vunpack.c.l.b16 %v295
    %v580 = vunpack.c.l.b16 %v296
    %v581 = vunpack.c.l.b16 %v297
    %v582 = vunpack.c.l.b16 %v298
    %v583 = vunpack.c.l.b16 %v299
    %v584 = vunpack.c.l.b16 %v300
    %v585 = vunpack.c.l.b16 %v301
    %v586 = vunpack.c.l.b16 %v302
    %v587 = vpack.c.b16 %v460, %v459
    %v588 = vpack.c.b16 %v462, %v461
    %v589 = vpack.c.b16 %v464, %v463
    %v590 = vpack.c.b16 %v466, %v465
    %v591 = vpack.c.b16 %v468, %v467
    %v592 = vpack.c.b16 %v470, %v469
    %v593 = vpack.c.b16 %v472, %v471
    %v594 = vpack.c.b16 %v474, %v473
    %v595 = vpack.c.b16 %v476, %v475
    %v596 = vpack.c.b16 %v478, %v477
    %v597 = vpack.c.b16 %v480, %v479
    %v598 = vpack.c.b16 %v482, %v481
    %v599 = vpack.c.b16 %v484, %v483
    %v600 = vpack.c.b16 %v486, %v485
    %v601 = vpack.c.b16 %v488, %v487
    %v602 = vpack.c.b16 %v490, %v489
    %v603 = vpack.c.b16 %v492, %v491
    %v604 = vpack.c.b16 %v494, %v493
    %v605 = vpack.c.b16 %v496, %v495
    %v606 = vpack.c.b16 %v498, %v497
    %v607 = vpack.c.b16 %v500, %v499
    %v608 = vpack.c.b16 %v502, %v501
    %v609 = vpack.c.b16 %v504, %v503
    %v610 = vpack.c.b16 %v506, %v505
    %v611 = vpack.c.b16 %v508, %v507
    %v612 = vpack.c.b16 %v510, %v509
    %v613 = vpack.c.b16 %v512, %v511
    %v614 = vpack.c.b16 %v514, %v513
    %v615 = vpack.c.b16 %v516, %v515
    %v616 = vpack.c.b16 %v518, %v517
    %v617 = vpack.c.b16 %v520, %v519
    %v618 = vpack.c.b16 %v522, %v521
    %v619 = vpack.c.b16 %v524, %v523
    %v620 = vpack.c.b16 %v526, %v525
    %v621 = vpack.c.b16 %v528, %v527
    %v622 = vpack.c.b16 %v530, %v529
    %v623 = vpack.c.b16 %v532, %v531
    %v624 = vpack.c.b16 %v534, %v533
    %v625 = vpack.c.b16 %v536, %v535
    %v626 = vpack.c.b16 %v538, %v537
    %v627 = vpack.c.b16 %v540, %v539
    %v628 = vpack.c.b16 %v542, %v541
    %v629 = vpack.c.b16 %v544, %v543
    %v630 = vpack.c.b16 %v546, %v545
    %v631 = vpack.c.b16 %v548, %v547
    %v632 = vpack.c.b16 %v550, %v549
    %v633 = vpack.c.b16 %v552, %v551
    %v634 = vpack.c.b16 %v554, %v553
    %v635 = vpack.c.b16 %v556, %v555
    %v636 = vpack.c.b16 %v558, %v557
    %v637 = vpack.c.b16 %v560, %v559
    %v638 = vpack.c.b16 %v562, %v561
    %v639 = vpack.c.b16 %v564, %v563
    %v640 = vpack.c.b16 %v566, %v565
    %v641 = vpack.c.b16 %v568, %v567
    %v642 = vpack.c.b16 %v570, %v569
    %v643 = vpack.c.b16 %v572, %v571
    %v644 = vpack.c.b16 %v574, %v573
    %v645 = vpack.c.b16 %v576, %v575
    %v646 = vpack.c.b16 %v578, %v577
    %v647 = vpack.c.b16 %v580, %v579
    %v648 = vpack.c.b16 %v582, %v581
    %v649 = vpack.c.b16 %v584, %v583
    %v650 = vpack.c.b16 %v586, %v585
    %715 = vmatpush.bf16.msra.mxu0 %v594
    %716 = vmatpush.bf16.msra.mxu0 %v593
    %717 = vmatpush.bf16.msra.mxu0 %v592
    %718 = vmatpush.bf16.msra.mxu0 %v591
    %719 = vmatpush.bf16.msra.mxu0 %v590
    %720 = vmatpush.bf16.msra.mxu0 %v589
    %721 = vmatpush.bf16.msra.mxu0 %v588
    %722 = vmatpush.bf16.msra.mxu0 %v587
    %723 = vmatmul.bf16.gmra.mxu0 %v315
    %v724 = vpop.f32.mrf.mxu0
    %v725 = vadd.f32 0.0, %v724
    %v726 = vpop.f32.mrf.mxu0
    %727 = vdwg.mxu0
    %728 = vmatpush.bf16.msra.mxu0 %v602
    %729 = vmatpush.bf16.msra.mxu0 %v601
    %730 = vmatpush.bf16.msra.mxu0 %v600
    %731 = vmatpush.bf16.msra.mxu0 %v599
    %732 = vmatpush.bf16.msra.mxu0 %v598
    %733 = vmatpush.bf16.msra.mxu0 %v597
    %734 = vmatpush.bf16.msra.mxu0 %v596
    %735 = vmatpush.bf16.msra.mxu0 %v595
    %736 = vmatmul.bf16.gmra.mxu0 %v316
    %v737 = vpop.f32.mrf.mxu0
    %v738 = vadd.f32 %v725, %v737
    %v739 = vpop.f32.mrf.mxu0
    %740 = vdwg.mxu0
    %741 = vmatpush.bf16.msra.mxu0 %v610
    %742 = vmatpush.bf16.msra.mxu0 %v609
    %743 = vmatpush.bf16.msra.mxu0 %v608
    %744 = vmatpush.bf16.msra.mxu0 %v607
    %745 = vmatpush.bf16.msra.mxu0 %v606
    %746 = vmatpush.bf16.msra.mxu0 %v605
    %747 = vmatpush.bf16.msra.mxu0 %v604
    %748 = vmatpush.bf16.msra.mxu0 %v603
    %749 = vmatmul.bf16.gmra.mxu0 %v317
    %v750 = vpop.f32.mrf.mxu0
    %v751 = vadd.f32 %v738, %v750
    %v752 = vpop.f32.mrf.mxu0
    %753 = vdwg.mxu0
    %754 = vmatpush.bf16.msra.mxu0 %v618
    %755 = vmatpush.bf16.msra.mxu0 %v617
    %756 = vmatpush.bf16.msra.mxu0 %v616
    %757 = vmatpush.bf16.msra.mxu0 %v615
    %758 = vmatpush.bf16.msra.mxu0 %v614
    %759 = vmatpush.bf16.msra.mxu0 %v613
    %760 = vmatpush.bf16.msra.mxu0 %v612
    %761 = vmatpush.bf16.msra.mxu0 %v611
    %762 = vmatmul.bf16.gmra.mxu0 %v318
    %v763 = vpop.f32.mrf.mxu0
    %v764 = vadd.f32 %v751, %v763
    %v765 = vpop.f32.mrf.mxu0
    %766 = vdwg.mxu0
    %767 = vmatpush.bf16.msra.mxu0 %v626
    %768 = vmatpush.bf16.msra.mxu0 %v625
    %769 = vmatpush.bf16.msra.mxu0 %v624
    %770 = vmatpush.bf16.msra.mxu0 %v623
    %771 = vmatpush.bf16.msra.mxu0 %v622
    %772 = vmatpush.bf16.msra.mxu0 %v621
    %773 = vmatpush.bf16.msra.mxu0 %v620
    %774 = vmatpush.bf16.msra.mxu0 %v619
    %775 = vmatmul.bf16.gmra.mxu0 %v319
    %v776 = vpop.f32.mrf.mxu0
    %v777 = vadd.f32 %v764, %v776
    %v778 = vpop.f32.mrf.mxu0
    %779 = vdwg.mxu0
    %780 = vmatpush.bf16.msra.mxu0 %v634
    %781 = vmatpush.bf16.msra.mxu0 %v633
    %782 = vmatpush.bf16.msra.mxu0 %v632
    %783 = vmatpush.bf16.msra.mxu0 %v631
    %784 = vmatpush.bf16.msra.mxu0 %v630
    %785 = vmatpush.bf16.msra.mxu0 %v629
    %786 = vmatpush.bf16.msra.mxu0 %v628
    %787 = vmatpush.bf16.msra.mxu0 %v627
    %788 = vmatmul.bf16.gmra.mxu0 %v320
    %v789 = vpop.f32.mrf.mxu0
    %v790 = vadd.f32 %v777, %v789
    %v791 = vpop.f32.mrf.mxu0
    %792 = vdwg.mxu0
    %793 = vmatpush.bf16.msra.mxu0 %v642
    %794 = vmatpush.bf16.msra.mxu0 %v641
    %795 = vmatpush.bf16.msra.mxu0 %v640
    %796 = vmatpush.bf16.msra.mxu0 %v639
    %797 = vmatpush.bf16.msra.mxu0 %v638
    %798 = vmatpush.bf16.msra.mxu0 %v637
    %799 = vmatpush.bf16.msra.mxu0 %v636
    %800 = vmatpush.bf16.msra.mxu0 %v635
    %801 = vmatmul.bf16.gmra.mxu0 %v321
    %v802 = vpop.f32.mrf.mxu0
    %v803 = vadd.f32 %v790, %v802
    %v804 = vpop.f32.mrf.mxu0
    %805 = vdwg.mxu0
    %806 = vmatpush.bf16.msra.mxu0 %v650
    %807 = vmatpush.bf16.msra.mxu0 %v649
    %808 = vmatpush.bf16.msra.mxu0 %v648
    %809 = vmatpush.bf16.msra.mxu0 %v647
    %810 = vmatpush.bf16.msra.mxu0 %v646
    %811 = vmatpush.bf16.msra.mxu0 %v645
    %812 = vmatpush.bf16.msra.mxu0 %v644
    %813 = vmatpush.bf16.msra.mxu0 %v643
    %814 = vmatmul.bf16.gmra.mxu0 %v322
    %v815 = vpop.f32.mrf.mxu0
    %v816 = vadd.f32 %v803, %v815
    %v817 = vpop.f32.mrf.mxu0
    %818 = vdwg.mxu0
    %v819 = vadd.f32 %v170, %v816
    %820 = vst [vmem:[#allocation2] sm:$0xff] %v819
    // Predicated region
    $region42: #{tpu_custom_call.1} parent=1 // pred_check
      %p821 = pneg %p78
    $region43: #{tpu_custom_call.1} parent=1 // pred_check_branch
      %823 = sbr.rel (%p821) target = $region45
    $region44: #{tpu_custom_call.1} parent=1 // pred_region
      %v824 = vld [vmem:[#allocation2] sm:$0xff]
      %825 = vst [vmem:[#allocation12] sm:$0xff] %v824
    $region45: #{tpu_custom_call.1} parent=1 // pred_fallthru
      _
    // Predicated region
    $region46: #{tpu_custom_call.1} parent=1 // pred_check
      _
    $region47: #{tpu_custom_call.1} parent=1 // pred_check_branch
      %827 = sbr.rel (0) target = $region49
    $region48: #{tpu_custom_call.1} parent=1 // pred_region
      %829 = vsyncadd [#allocation6], 0
      %s831 = sshll.u32 [#allocation12], 4
      %s832 = int_to_ptr.vmem [resolvable:$true] %s831
      %s833 = sshll.u32 %s5, 4
      %s834 = int_to_ptr.hbm [resolvable:$true] %s833
      %836 = dma.vmem_to_hbm [thread:$0]  %s832, 128, %s834, [#allocation6]
    $region49: #{tpu_custom_call.1} parent=1 // pred_fallthru
      _
    // Predicated region
    $region50: #{tpu_custom_call.1} parent=1 // pred_check
      _
    $region51: #{tpu_custom_call.1} parent=1 // pred_check_branch
      %838 = sbr.rel (0) target = $region53
    $region52: #{tpu_custom_call.1} parent=1 // pred_region
      %840 = dma.done [#allocation6], 128
    $region53: #{tpu_custom_call.1} parent=1 // pred_fallthru
      _
    %841 = vsyncpa [#allocation5], 1
    %842 = vsyncpa [#allocation8], 1
    %843 = vsyncpa [#allocation11], 1
    %844 = vsyncpa [#allocation6], 1

</llo_original>
